<compile_context>
chip_gen: v7x
topology: tpu7x:2x2x1
jax: 0.10.0
libtpu: 0.0.40
codegen_flags: <defaults>
</compile_context>

<pallas_src>
import functools

import jax
import jax.numpy as jnp
from jax import lax
from jax.experimental import pallas as pl
from jax.experimental.pallas import tpu as pltpu


def _lane_block_size():
    """256-lane blocks for the 2x256^2 MXU generations (v6e/v7x), 128 for v5."""
    try:
        kind = jax.devices()[0].device_kind.lower()
    except Exception:
        kind = ""
    return 128 if "v5" in kind else 256


def _coxph_kernel(n_ref, logh_ref, ev_ref, num_ref, den_ref,
                  tri_ref, carry_ref, *, rc, b, alpha, eps):
    """Process one (rc, b) chunk of max-shifted, duration-sorted log-hazards."""
    t = pl.program_id(0)

    @pl.when(t == 0)
    def _init():
        # (b, b) inclusive lower-triangular ones: tri[j', j] = 1 iff j' <= j.
        rj = lax.broadcasted_iota(jnp.int32, (b, b), 0)
        cj = lax.broadcasted_iota(jnp.int32, (b, b), 1)
        tri_ref[...] = (rj <= cj).astype(jnp.float32)
        carry_ref[...] = jnp.zeros_like(carry_ref)
        num_ref[...] = jnp.zeros_like(num_ref)
        den_ref[...] = jnp.zeros_like(den_ref)

    n = n_ref[0]                                   # true (unpadded) length
    logh = logh_ref[...]                           # (rc, b) = log_h - gamma
    ev = ev_ref[...]                               # (rc, b) events in {0,1}

    # Validity mask from the global linear index of each element.
    row = lax.broadcasted_iota(jnp.int32, (rc, b), 0) + t * rc
    col = lax.broadcasted_iota(jnp.int32, (rc, b), 1)
    valid = (row * b + col) < n

    shifted = jnp.where(valid, logh, jnp.float32(-1e30))
    exp_v = jnp.exp(shifted)                       # padded lanes -> exactly 0

    # Intra-row inclusive prefix sums on the MXU.
    intra = jnp.dot(exp_v, tri_ref[...], preferred_element_type=jnp.float32)

    if rc > 1:
        # Sum of all rows strictly above each row, within this chunk.
        ri = lax.broadcasted_iota(jnp.int32, (rc, rc), 0)
        ci = lax.broadcasted_iota(jnp.int32, (rc, rc), 1)
        strict = (ci < ri).astype(jnp.float32)
        excl = jnp.dot(strict, exp_v, preferred_element_type=jnp.float32)
        prev_rows = jnp.sum(excl, axis=1, keepdims=True)        # (rc, 1)
        csum = intra + prev_rows + carry_ref[...]
    else:
        csum = intra + carry_ref[...]

    # log_cumsum_h - gamma  (gamma was folded into the input).
    log_csum = jnp.log(csum + jnp.float32(eps))

    # Weights: w = 1 - events; w[w == 0] = alpha; padded lanes -> 0.
    # (Exact ==0.0 comparison mirrors the PyTorch reference.)
    w = jnp.float32(1.0) - ev
    w = jnp.where(w == jnp.float32(0.0), jnp.float32(alpha), w)
    w = jnp.where(valid, w, jnp.float32(0.0))

    num_ref[...] = num_ref[...] + jnp.sum((logh - log_csum) * w)
    den_ref[...] = den_ref[...] + jnp.sum(w)
    carry_ref[...] = carry_ref[...] + jnp.sum(exp_v)


def coxph_loss_pallas(S, c, event_time, alpha, eps=1e-7):
    """CoxPHLoss.forward(S, c, event_time) -> scalar loss (Pallas TPU)."""
    log_h = jnp.reshape(S, (-1,)).astype(jnp.float32)
    events = jnp.reshape(c, (-1,)).astype(jnp.float32)
    durations = jnp.reshape(event_time, (-1,))

    # Sort by descending duration (data-dependent permutation: JAX glue).
    idx = jnp.argsort(-durations)
    log_h = log_h[idx]
    events = events[idx]

    n = int(log_h.shape[0])
    # Global max is needed before any streamed cumsum; it cancels exactly in
    # (log_h - log_cumsum_h), so fold it into the input.
    gamma = jnp.max(log_h)
    shifted = log_h - gamma

    b = _lane_block_size()
    rows_needed = max(1, pl.cdiv(n, b))
    max_rows_per_chunk = 64
    if rows_needed == 1:
        rc, num_chunks = 1, 1
    elif rows_needed <= max_rows_per_chunk:
        rc = ((rows_needed + 7) // 8) * 8          # sublane-aligned single chunk
        num_chunks = 1
    else:
        rc = max_rows_per_chunk
        num_chunks = pl.cdiv(rows_needed, rc)
    total_rows = rc * num_chunks
    p = total_rows * b

    shifted_p = jnp.zeros((p,), jnp.float32).at[:n].set(shifted).reshape(total_rows, b)
    ev_p = jnp.zeros((p,), jnp.float32).at[:n].set(events).reshape(total_rows, b)
    n_arr = jnp.asarray([n], dtype=jnp.int32)      # scalar-prefetch (SMEM)

    kern = functools.partial(_coxph_kernel, rc=rc, b=b,
                             alpha=float(alpha), eps=float(eps))
    num, den = pl.pallas_call(
        kern,
        out_shape=(jax.ShapeDtypeStruct((1, 1), jnp.float32),
                   jax.ShapeDtypeStruct((1, 1), jnp.float32)),
        grid_spec=pltpu.PrefetchScalarGridSpec(
            num_scalar_prefetch=1,
            grid=(num_chunks,),
            in_specs=[
                pl.BlockSpec((rc, b), lambda t, n_s: (t, 0)),
                pl.BlockSpec((rc, b), lambda t, n_s: (t, 0)),
            ],
            out_specs=[
                pl.BlockSpec((1, 1), lambda t, n_s: (0, 0)),
                pl.BlockSpec((1, 1), lambda t, n_s: (0, 0)),
            ],
            scratch_shapes=[
                pltpu.VMEM((b, b), jnp.float32),    # lower-triangular ones
                pltpu.VMEM((1, 1), jnp.float32),    # running exp-sum carry
            ],
        ),
        compiler_params=pltpu.CompilerParams(
            dimension_semantics=("arbitrary",)),    # sequential prefix carry
    )(n_arr, shifted_p, ev_p)

    num = num[0, 0]
    den = den[0, 0]
    # Guard den == 0 (e.g. alpha == 0 and all events) instead of emitting NaN.
    safe_den = jnp.where(den > 0, den, jnp.float32(1.0))
    return jnp.where(den > 0, -num / safe_den, jnp.float32(0.0))


def coxph_loss_ref(S, c, event_time, alpha, eps=1e-7):
    """Pure-JAX reference mirroring the PyTorch module."""
    log_h = jnp.reshape(S, (-1,)).astype(jnp.float32)
    events = jnp.reshape(c, (-1,)).astype(jnp.float32)
    idx = jnp.argsort(-jnp.reshape(event_time, (-1,)))
    log_h = log_h[idx]
    events = events[idx]
    w = 1.0 - events
    w = jnp.where(w == 0.0, jnp.float32(alpha), w)
    gamma = jnp.max(log_h)
    log_csum = jnp.log(jnp.cumsum(jnp.exp(log_h - gamma)) + eps) + gamma
    return -jnp.sum((log_h - log_csum) * w) / jnp.sum(w)


if __name__ == "__main__":
    alpha = 0.5
    key = jax.random.PRNGKey(0)

    # Small example consistent with the module's 1-D (batch,) inputs.
    N = 8
    k1, k2, k3 = jax.random.split(key, 3)
    S = jax.random.normal(k1, (N,), dtype=jnp.float32)                   # log-hazards
    c = (jax.random.uniform(k2, (N,)) < 0.5).astype(jnp.float32)         # event indicators
    event_time = jax.random.uniform(k3, (N,), dtype=jnp.float32) * 10.0  # durations

    loss = jax.block_until_ready(coxph_loss_pallas(S, c, event_time, alpha))
    ref = jax.block_until_ready(coxph_loss_ref(S, c, event_time, alpha))
    assert jnp.isfinite(loss), f"non-finite loss: {loss}"
    assert jnp.allclose(loss, ref, rtol=1e-5, atol=1e-5), (float(loss), float(ref))

    # Extra checks exercising the blocked (multi-row) and chunked (carry) paths.
    for N2 in (2000, 20000):
        ka, kb, kc, key = jax.random.split(key, 4)
        S2 = jax.random.normal(ka, (N2,), dtype=jnp.float32)
        c2 = (jax.random.uniform(kb, (N2,)) < 0.5).astype(jnp.float32)
        t2 = jax.random.uniform(kc, (N2,), dtype=jnp.float32) * 10.0
        l2 = jax.block_until_ready(coxph_loss_pallas(S2, c2, t2, alpha))
        r2 = jax.block_until_ready(coxph_loss_ref(S2, c2, t2, alpha))
        assert jnp.allclose(l2, r2, rtol=1e-4, atol=1e-4), (N2, float(l2), float(r2))

    print("KERNEL_OK")
</pallas_src>

<mosaic_0001>
module attributes {stable_mosaic.version = 11 : i64} {
  func.func @_coxph_kernel(%arg0: i32, %arg1: memref<1xi32, #tpu.memory_space<smem>>, %arg2: memref<1x256xf32, #tpu.memory_space<vmem>>, %arg3: memref<1x256xf32, #tpu.memory_space<vmem>>, %arg4: memref<1x1xf32, #tpu.memory_space<vmem>>, %arg5: memref<1x1xf32, #tpu.memory_space<vmem>>, %arg6: memref<256x256xf32, #tpu.memory_space<vmem>>, %arg7: memref<1x1xf32, #tpu.memory_space<vmem>>) attributes {dimension_semantics = [#tpu.dimension_semantics<arbitrary>], iteration_bounds = array<i64: 1>, scalar_prefetch = 1 : i64, scratch_operands = 2 : i64, tpu.core_type = #tpu.core_type<tc>, window_params = [{transform_indices = @transform_0, window_bounds = array<i64: 1, 256>}, {transform_indices = @transform_1, window_bounds = array<i64: 1, 256>}, {pipeline_mode = #tpu.pipeline_mode<synchronous>, transform_indices = @transform_2, window_bounds = array<i64: 1, 1>}, {pipeline_mode = #tpu.pipeline_mode<synchronous>, transform_indices = @transform_3, window_bounds = array<i64: 1, 1>}]} {
    %c0_i32 = arith.constant 0 : i32
    %0 = arith.cmpi eq, %arg0, %c0_i32 : i32
    %1 = arith.extui %0 : i1 to i32
    %c0_i32_0 = arith.constant 0 : i32
    %2 = arith.cmpi ne, %1, %c0_i32_0 : i32
    scf.if %2 {
      %61 = tpu.iota {dimensions = array<i32: 0>} : vector<256x256xi32>
      %62 = tpu.iota {dimensions = array<i32: 1>} : vector<256x256xi32>
      %63 = arith.cmpi sle, %61, %62 : vector<256x256xi32>
      %64 = arith.extui %63 : vector<256x256xi1> to vector<256x256xi32>
      %65 = arith.sitofp %64 : vector<256x256xi32> to vector<256x256xf32>
      %c0_30 = arith.constant 0 : index
      %c0_31 = arith.constant 0 : index
      %66 = vector.load %arg6[%c0_30, %c0_31] : memref<256x256xf32, #tpu.memory_space<vmem>>, vector<256x256xf32>
      tpu.vector_store %arg6[%c0_30, %c0_31], %65 {strides = array<i32>} : memref<256x256xf32, #tpu.memory_space<vmem>>, vector<256x256xf32>,
      %cst_32 = arith.constant 0.000000e+00 : f32
      %67 = vector.broadcast %cst_32 : f32 to vector<1x1xf32>
      %c0_33 = arith.constant 0 : index
      %c0_34 = arith.constant 0 : index
      %68 = vector.load %arg7[%c0_33, %c0_34] : memref<1x1xf32, #tpu.memory_space<vmem>>, vector<1x1xf32>
      tpu.vector_store %arg7[%c0_33, %c0_34], %67 {strides = array<i32>} : memref<1x1xf32, #tpu.memory_space<vmem>>, vector<1x1xf32>,
      %cst_35 = arith.constant 0.000000e+00 : f32
      %69 = vector.broadcast %cst_35 : f32 to vector<1x1xf32>
      %c0_36 = arith.constant 0 : index
      %c0_37 = arith.constant 0 : index
      %70 = vector.load %arg4[%c0_36, %c0_37] : memref<1x1xf32, #tpu.memory_space<vmem>>, vector<1x1xf32>
      tpu.vector_store %arg4[%c0_36, %c0_37], %69 {strides = array<i32>} : memref<1x1xf32, #tpu.memory_space<vmem>>, vector<1x1xf32>,
      %cst_38 = arith.constant 0.000000e+00 : f32
      %71 = vector.broadcast %cst_38 : f32 to vector<1x1xf32>
      %c0_39 = arith.constant 0 : index
      %c0_40 = arith.constant 0 : index
      %72 = vector.load %arg5[%c0_39, %c0_40] : memref<1x1xf32, #tpu.memory_space<vmem>>, vector<1x1xf32>
      tpu.vector_store %arg5[%c0_39, %c0_40], %71 {strides = array<i32>} : memref<1x1xf32, #tpu.memory_space<vmem>>, vector<1x1xf32>,
    } else {
    }
    %c0 = arith.constant 0 : index
    %3 = memref.load %arg1[%c0] : memref<1xi32, #tpu.memory_space<smem>>
    %c0_1 = arith.constant 0 : index
    %c0_2 = arith.constant 0 : index
    %4 = vector.load %arg2[%c0_1, %c0_2] : memref<1x256xf32, #tpu.memory_space<vmem>>, vector<1x256xf32>
    %c0_3 = arith.constant 0 : index
    %c0_4 = arith.constant 0 : index
    %5 = vector.load %arg3[%c0_3, %c0_4] : memref<1x256xf32, #tpu.memory_space<vmem>>, vector<1x256xf32>
    %6 = tpu.iota {dimensions = array<i32: 0>} : vector<1x256xi32>
    %c1_i32 = arith.constant 1 : i32
    %7 = arith.muli %arg0, %c1_i32 : i32
    %8 = vector.broadcast %7 : i32 to vector<1x256xi32>
    %9 = arith.addi %6, %8 : vector<1x256xi32>
    %10 = tpu.iota {dimensions = array<i32: 1>} : vector<1x256xi32>
    %c256_i32 = arith.constant 256 : i32
    %11 = vector.broadcast %c256_i32 : i32 to vector<1x256xi32>
    %12 = arith.muli %9, %11 : vector<1x256xi32>
    %13 = arith.addi %12, %10 : vector<1x256xi32>
    %14 = vector.broadcast %3 : i32 to vector<1x256xi32>
    %15 = arith.cmpi slt, %13, %14 : vector<1x256xi32>
    %cst = arith.constant -1.000000e+30 : f32
    %16 = vector.broadcast %cst : f32 to vector<1x256xf32>
    %17 = arith.select %15, %4, %16 : vector<1x256xi1>, vector<1x256xf32>
    %18 = math.exp %17 : vector<1x256xf32>
    %c0_5 = arith.constant 0 : index
    %c0_6 = arith.constant 0 : index
    %19 = vector.load %arg6[%c0_5, %c0_6] : memref<256x256xf32, #tpu.memory_space<vmem>>, vector<256x256xf32>
    %cst_7 = arith.constant dense<0.000000e+00> : vector<1x256xf32>
    %20 = tpu.matmul %18, %19, %cst_7 {dimension_numbers = #tpu.dot_dimension_numbers<[1], [0], [0], [1], [0, 0, 1, 1], [], []>} : vector<1x256xf32>, vector<256x256xf32>, vector<1x256xf32> -> vector<1x256xf32>
    %c0_8 = arith.constant 0 : index
    %c0_9 = arith.constant 0 : index
    %21 = vector.load %arg7[%c0_8, %c0_9] : memref<1x1xf32, #tpu.memory_space<vmem>>, vector<1x1xf32>
    %22 = vector.broadcast %21 : vector<1x1xf32> to vector<1x256xf32>
    %23 = arith.addf %20, %22 : vector<1x256xf32>
    %cst_10 = arith.constant 1.000000e-07 : f32
    %24 = vector.broadcast %cst_10 : f32 to vector<1x256xf32>
    %25 = arith.addf %23, %24 : vector<1x256xf32>
    %26 = math.log %25 : vector<1x256xf32>
    %cst_11 = arith.constant 1.000000e+00 : f32
    %27 = vector.broadcast %cst_11 : f32 to vector<1x256xf32>
    %28 = arith.subf %27, %5 : vector<1x256xf32>
    %cst_12 = arith.constant 0.000000e+00 : f32
    %29 = vector.broadcast %cst_12 : f32 to vector<1x256xf32>
    %30 = arith.cmpf oeq, %28, %29 : vector<1x256xf32>
    %cst_13 = arith.constant 5.000000e-01 : f32
    %31 = vector.broadcast %cst_13 : f32 to vector<1x256xf32>
    %32 = arith.select %30, %31, %28 : vector<1x256xi1>, vector<1x256xf32>
    %cst_14 = arith.constant 0.000000e+00 : f32
    %33 = vector.broadcast %cst_14 : f32 to vector<1x256xf32>
    %34 = arith.select %15, %32, %33 : vector<1x256xi1>, vector<1x256xf32>
    %c0_15 = arith.constant 0 : index
    %c0_16 = arith.constant 0 : index
    %35 = vector.load %arg4[%c0_15, %c0_16] : memref<1x1xf32, #tpu.memory_space<vmem>>, vector<1x1xf32>
    %36 = arith.subf %4, %26 : vector<1x256xf32>
    %37 = arith.mulf %36, %34 : vector<1x256xf32>
    %38 = vector.shape_cast %37 : vector<1x256xf32> to vector<1x1x256xf32>
    %cst_17 = arith.constant dense<0.000000e+00> : vector<1xf32>
    %39 = vector.multi_reduction <add>, %38, %cst_17 [1, 2] : vector<1x1x256xf32> to vector<1xf32>
    %40 = vector.shape_cast %39 : vector<1xf32> to vector<1x1x1xf32>
    %41 = vector.extract %40[0, 0, 0] : f32 from vector<1x1x1xf32>
    %42 = vector.broadcast %41 : f32 to vector<1x1xf32>
    %43 = arith.addf %35, %42 : vector<1x1xf32>
    %c0_18 = arith.constant 0 : index
    %c0_19 = arith.constant 0 : index
    %44 = vector.load %arg4[%c0_18, %c0_19] : memref<1x1xf32, #tpu.memory_space<vmem>>, vector<1x1xf32>
    tpu.vector_store %arg4[%c0_18, %c0_19], %43 {strides = array<i32>} : memref<1x1xf32, #tpu.memory_space<vmem>>, vector<1x1xf32>,
    %c0_20 = arith.constant 0 : index
    %c0_21 = arith.constant 0 : index
    %45 = vector.load %arg5[%c0_20, %c0_21] : memref<1x1xf32, #tpu.memory_space<vmem>>, vector<1x1xf32>
    %46 = vector.shape_cast %34 : vector<1x256xf32> to vector<1x1x256xf32>
    %cst_22 = arith.constant dense<0.000000e+00> : vector<1xf32>
    %47 = vector.multi_reduction <add>, %46, %cst_22 [1, 2] : vector<1x1x256xf32> to vector<1xf32>
    %48 = vector.shape_cast %47 : vector<1xf32> to vector<1x1x1xf32>
    %49 = vector.extract %48[0, 0, 0] : f32 from vector<1x1x1xf32>
    %50 = vector.broadcast %49 : f32 to vector<1x1xf32>
    %51 = arith.addf %45, %50 : vector<1x1xf32>
    %c0_23 = arith.constant 0 : index
    %c0_24 = arith.constant 0 : index
    %52 = vector.load %arg5[%c0_23, %c0_24] : memref<1x1xf32, #tpu.memory_space<vmem>>, vector<1x1xf32>
    tpu.vector_store %arg5[%c0_23, %c0_24], %51 {strides = array<i32>} : memref<1x1xf32, #tpu.memory_space<vmem>>, vector<1x1xf32>,
    %c0_25 = arith.constant 0 : index
    %c0_26 = arith.constant 0 : index
    %53 = vector.load %arg7[%c0_25, %c0_26] : memref<1x1xf32, #tpu.memory_space<vmem>>, vector<1x1xf32>
    %54 = vector.shape_cast %18 : vector<1x256xf32> to vector<1x1x256xf32>
    %cst_27 = arith.constant dense<0.000000e+00> : vector<1xf32>
    %55 = vector.multi_reduction <add>, %54, %cst_27 [1, 2] : vector<1x1x256xf32> to vector<1xf32>
    %56 = vector.shape_cast %55 : vector<1xf32> to vector<1x1x1xf32>
    %57 = vector.extract %56[0, 0, 0] : f32 from vector<1x1x1xf32>
    %58 = vector.broadcast %57 : f32 to vector<1x1xf32>
    %59 = arith.addf %53, %58 : vector<1x1xf32>
    %c0_28 = arith.constant 0 : index
    %c0_29 = arith.constant 0 : index
    %60 = vector.load %arg7[%c0_28, %c0_29] : memref<1x1xf32, #tpu.memory_space<vmem>>, vector<1x1xf32>
    tpu.vector_store %arg7[%c0_28, %c0_29], %59 {strides = array<i32>} : memref<1x1xf32, #tpu.memory_space<vmem>>, vector<1x1xf32>,
    return
  }
  func.func @transform_0(%arg0: i32, %arg1: memref<1xi32, #tpu.memory_space<smem>>) -> (i32, i32) {
    %c0_i32 = arith.constant 0 : i32
    %c0_i32_0 = arith.constant 0 : i32
    return %arg0, %c0_i32 : i32, i32
  }
  func.func @transform_1(%arg0: i32, %arg1: memref<1xi32, #tpu.memory_space<smem>>) -> (i32, i32) {
    %c0_i32 = arith.constant 0 : i32
    %c0_i32_0 = arith.constant 0 : i32
    return %arg0, %c0_i32 : i32, i32
  }
  func.func @transform_2(%arg0: i32, %arg1: memref<1xi32, #tpu.memory_space<smem>>) -> (i32, i32) {
    %c0_i32 = arith.constant 0 : i32
    %c0_i32_0 = arith.constant 0 : i32
    %c0_i32_1 = arith.constant 0 : i32
    return %c0_i32, %c0_i32_0 : i32, i32
  }
  func.func @transform_3(%arg0: i32, %arg1: memref<1xi32, #tpu.memory_space<smem>>) -> (i32, i32) {
    %c0_i32 = arith.constant 0 : i32
    %c0_i32_0 = arith.constant 0 : i32
    %c0_i32_1 = arith.constant 0 : i32
    return %c0_i32, %c0_i32_0 : i32, i32
  }
}

</mosaic_0001>

<llo_original>
// kernel: tpu_custom_call.1
$region0: #{tpu_custom_call.1}
  #allocation0 [shape = 'u32[]', space=smem, size = 0x4, offset = 0x4, fixed_abs, tag = 'smem constant byte address 0x4 - core index']
  #allocation1 [shape = 'u32[144,128]{1,0:T(1,128)}', space=vmem, size = 0x12000, scoped, tag = 'internal scratch']
  #allocation2 [shape = 'f32[256,256]{1,0:T(8,128)}', space=vmem, size = 0x40000, scoped, tag = 'scratch operand']
  #allocation3 [shape = 'f32[1,1]{1,0:T(1,128)}', space=vmem, size = 0x200, scoped, tag = 'scratch operand']
  #allocation4 [shape = 's32[1]{0}', space=sflag, size = 0x4, scoped, tag = 'scoped memory for tpu_custom_call.1']
  #allocation5 [shape = 's32[1]{0:T(128)S(6)}', space=smem, size = 0x200, scoped, tag = 'prefetched SMEM operand 0']
  %s0 = inlined_call_operand.<no memory space> [shape: s32[1], index: 0, kind: input, shape index: {}]
  %s1 = inlined_call_operand.vmem [shape: f32[1,256], index: 1, kind: input, shape index: {}]
  %s2 = inlined_call_operand.vmem [shape: f32[1,256], index: 2, kind: input, shape index: {}]
  %s3 = inlined_call_operand.hbm [shape: f32[1,1], index: 3, kind: output, shape index: {0}]
  %s4 = inlined_call_operand.hbm [shape: f32[1,1], index: 4, kind: output, shape index: {1}]
  %5 = xla_tuple %s3, %s4
  %s6 = sld [smem:[#allocation0]]
  $region30: #{tpu_custom_call.1} parent=0
    _
  %s8 = ssub.s32 1, %s6
  %s9 = scalar_select 0, %s8, %s6
  %10 = sst [smem:[#allocation5]] %s0
  $region1: #{tpu_custom_call.1} parent=0
    #allocation6 [shape = 'u8[512]{0}', space=vmem, size = 0x400, scoped, tag = 'output window, operand 0, single buffered']
    #allocation7 [shape = 's32[1]{0}', space=sflag, size = 0x4, scoped, tag = 'scoped memory for tpu_custom_call.1']
    #allocation8 [shape = 'u8[512]{0}', space=vmem, size = 0x400, scoped, tag = 'output window, operand 1, single buffered']
    #allocation9 [shape = 's32[1]{0}', space=sflag, size = 0x4, scoped, tag = 'scoped memory for tpu_custom_call.1']
    %11 = vsyncpa [#allocation7], 0
    %12 = vsyncpa [#allocation9], 0
    // Predicated region
    $region2: #{tpu_custom_call.1} parent=1 // pred_check
      _
    $region3: #{tpu_custom_call.1} parent=1 // pred_check_branch
      %14 = sbr.rel (0) target = $region5
    $region4: #{tpu_custom_call.1} parent=1 // pred_region
      _
    $region5: #{tpu_custom_call.1} parent=1 // pred_fallthru
      _
    // Predicated region
    $region6: #{tpu_custom_call.1} parent=1 // pred_check
      _
    $region7: #{tpu_custom_call.1} parent=1 // pred_check_branch
      %16 = sbr.rel (0) target = $region9
    $region8: #{tpu_custom_call.1} parent=1 // pred_region
      _
    $region9: #{tpu_custom_call.1} parent=1 // pred_fallthru
      _
    %p17 = scmp.eq.s32.totalorder 0, 0
    // Predicated region
    $region10: #{tpu_custom_call.1} parent=1 // pred_check
      %p18 = pneg %p17
    $region11: #{tpu_custom_call.1} parent=1 // pred_check_branch
      %20 = sbr.rel (%p18) target = $region13
    $region12: #{tpu_custom_call.1} parent=1 // pred_region
      %v21 = vlaneseq
      %v22 = vshrl.u32 %v21, 7
      %v23 = vadd.s32 %v22, 8
      %v24 = vadd.s32 %v22, 16
      %v25 = vadd.s32 %v22, 24
      %v26 = vadd.s32 %v22, 32
      %v27 = vadd.s32 %v22, 40
      %v28 = vadd.s32 %v22, 48
      %v29 = vadd.s32 %v22, 56
      %v30 = vadd.s32 %v22, 64
      %v31 = vadd.s32 %v22, 72
      %v32 = vadd.s32 %v22, 80
      %v33 = vadd.s32 %v22, 88
      %v34 = vadd.s32 %v22, 96
      %v35 = vadd.s32 %v22, 104
      %v36 = vadd.s32 %v22, 112
      %v37 = vadd.s32 %v22, 120
      %v38 = vadd.s32 %v22, 128
      %v39 = vadd.s32 %v22, 136
      %v40 = vadd.s32 %v22, 144
      %v41 = vadd.s32 %v22, 152
      %v42 = vadd.s32 %v22, 160
      %v43 = vadd.s32 %v22, 168
      %v44 = vadd.s32 %v22, 176
      %v45 = vadd.s32 %v22, 184
      %v46 = vadd.s32 %v22, 192
      %v47 = vadd.s32 %v22, 200
      %v48 = vadd.s32 %v22, 208
      %v49 = vadd.s32 %v22, 216
      %v50 = vadd.s32 %v22, 224
      %v51 = vadd.s32 %v22, 232
      %v52 = vadd.s32 %v22, 240
      %v53 = vadd.s32 %v22, 248
      %v54 = vlaneseq
      %v55 = vand.u32 %v54, 127
      %v56 = vadd.s32 %v55, 128
      %vm57 = vcmp.le.s32.totalorder %v22, %v55
      %vm58 = vcmp.le.s32.totalorder %v22, %v56
      %vm59 = vcmp.le.s32.totalorder %v23, %v55
      %vm60 = vcmp.le.s32.totalorder %v23, %v56
      %vm61 = vcmp.le.s32.totalorder %v24, %v55
      %vm62 = vcmp.le.s32.totalorder %v24, %v56
      %vm63 = vcmp.le.s32.totalorder %v25, %v55
      %vm64 = vcmp.le.s32.totalorder %v25, %v56
      %vm65 = vcmp.le.s32.totalorder %v26, %v55
      %vm66 = vcmp.le.s32.totalorder %v26, %v56
      %vm67 = vcmp.le.s32.totalorder %v27, %v55
      %vm68 = vcmp.le.s32.totalorder %v27, %v56
      %vm69 = vcmp.le.s32.totalorder %v28, %v55
      %vm70 = vcmp.le.s32.totalorder %v28, %v56
      %vm71 = vcmp.le.s32.totalorder %v29, %v55
      %vm72 = vcmp.le.s32.totalorder %v29, %v56
      %vm73 = vcmp.le.s32.totalorder %v30, %v55
      %vm74 = vcmp.le.s32.totalorder %v30, %v56
      %vm75 = vcmp.le.s32.totalorder %v31, %v55
      %vm76 = vcmp.le.s32.totalorder %v31, %v56
      %vm77 = vcmp.le.s32.totalorder %v32, %v55
      %vm78 = vcmp.le.s32.totalorder %v32, %v56
      %vm79 = vcmp.le.s32.totalorder %v33, %v55
      %vm80 = vcmp.le.s32.totalorder %v33, %v56
      %vm81 = vcmp.le.s32.totalorder %v34, %v55
      %vm82 = vcmp.le.s32.totalorder %v34, %v56
      %vm83 = vcmp.le.s32.totalorder %v35, %v55
      %vm84 = vcmp.le.s32.totalorder %v35, %v56
      %vm85 = vcmp.le.s32.totalorder %v36, %v55
      %vm86 = vcmp.le.s32.totalorder %v36, %v56
      %vm87 = vcmp.le.s32.totalorder %v37, %v55
      %vm88 = vcmp.le.s32.totalorder %v37, %v56
      %vm89 = vcmp.le.s32.totalorder %v38, %v55
      %vm90 = vcmp.le.s32.totalorder %v38, %v56
      %vm91 = vcmp.le.s32.totalorder %v39, %v55
      %vm92 = vcmp.le.s32.totalorder %v39, %v56
      %vm93 = vcmp.le.s32.totalorder %v40, %v55
      %vm94 = vcmp.le.s32.totalorder %v40, %v56
      %vm95 = vcmp.le.s32.totalorder %v41, %v55
      %vm96 = vcmp.le.s32.totalorder %v41, %v56
      %vm97 = vcmp.le.s32.totalorder %v42, %v55
      %vm98 = vcmp.le.s32.totalorder %v42, %v56
      %vm99 = vcmp.le.s32.totalorder %v43, %v55
      %vm100 = vcmp.le.s32.totalorder %v43, %v56
      %vm101 = vcmp.le.s32.totalorder %v44, %v55
      %vm102 = vcmp.le.s32.totalorder %v44, %v56
      %vm103 = vcmp.le.s32.totalorder %v45, %v55
      %vm104 = vcmp.le.s32.totalorder %v45, %v56
      %vm105 = vcmp.le.s32.totalorder %v46, %v55
      %vm106 = vcmp.le.s32.totalorder %v46, %v56
      %vm107 = vcmp.le.s32.totalorder %v47, %v55
      %vm108 = vcmp.le.s32.totalorder %v47, %v56
      %vm109 = vcmp.le.s32.totalorder %v48, %v55
      %vm110 = vcmp.le.s32.totalorder %v48, %v56
      %vm111 = vcmp.le.s32.totalorder %v49, %v55
      %vm112 = vcmp.le.s32.totalorder %v49, %v56
      %vm113 = vcmp.le.s32.totalorder %v50, %v55
      %vm114 = vcmp.le.s32.totalorder %v50, %v56
      %vm115 = vcmp.le.s32.totalorder %v51, %v55
      %vm116 = vcmp.le.s32.totalorder %v51, %v56
      %vm117 = vcmp.le.s32.totalorder %v52, %v55
      %vm118 = vcmp.le.s32.totalorder %v52, %v56
      %vm119 = vcmp.le.s32.totalorder %v53, %v55
      %vm120 = vcmp.le.s32.totalorder %v53, %v56
      %v121 = vsel %vm57, 1, 0
      %v122 = vsel %vm58, 1, 0
      %v123 = vsel %vm59, 1, 0
      %v124 = vsel %vm60, 1, 0
      %v125 = vsel %vm61, 1, 0
      %v126 = vsel %vm62, 1, 0
      %v127 = vsel %vm63, 1, 0
      %v128 = vsel %vm64, 1, 0
      %v129 = vsel %vm65, 1, 0
      %v130 = vsel %vm66, 1, 0
      %v131 = vsel %vm67, 1, 0
      %v132 = vsel %vm68, 1, 0
      %v133 = vsel %vm69, 1, 0
      %v134 = vsel %vm70, 1, 0
      %v135 = vsel %vm71, 1, 0
      %v136 = vsel %vm72, 1, 0
      %v137 = vsel %vm73, 1, 0
      %v138 = vsel %vm74, 1, 0
      %v139 = vsel %vm75, 1, 0
      %v140 = vsel %vm76, 1, 0
      %v141 = vsel %vm77, 1, 0
      %v142 = vsel %vm78, 1, 0
      %v143 = vsel %vm79, 1, 0
      %v144 = vsel %vm80, 1, 0
      %v145 = vsel %vm81, 1, 0
      %v146 = vsel %vm82, 1, 0
      %v147 = vsel %vm83, 1, 0
      %v148 = vsel %vm84, 1, 0
      %v149 = vsel %vm85, 1, 0
      %v150 = vsel %vm86, 1, 0
      %v151 = vsel %vm87, 1, 0
      %v152 = vsel %vm88, 1, 0
      %v153 = vsel %vm89, 1, 0
      %v154 = vsel %vm90, 1, 0
      %v155 = vsel %vm91, 1, 0
      %v156 = vsel %vm92, 1, 0
      %v157 = vsel %vm93, 1, 0
      %v158 = vsel %vm94, 1, 0
      %v159 = vsel %vm95, 1, 0
      %v160 = vsel %vm96, 1, 0
      %v161 = vsel %vm97, 1, 0
      %v162 = vsel %vm98, 1, 0
      %v163 = vsel %vm99, 1, 0
      %v164 = vsel %vm100, 1, 0
      %v165 = vsel %vm101, 1, 0
      %v166 = vsel %vm102, 1, 0
      %v167 = vsel %vm103, 1, 0
      %v168 = vsel %vm104, 1, 0
      %v169 = vsel %vm105, 1, 0
      %v170 = vsel %vm106, 1, 0
      %v171 = vsel %vm107, 1, 0
      %v172 = vsel %vm108, 1, 0
      %v173 = vsel %vm109, 1, 0
      %v174 = vsel %vm110, 1, 0
      %v175 = vsel %vm111, 1, 0
      %v176 = vsel %vm112, 1, 0
      %v177 = vsel %vm113, 1, 0
      %v178 = vsel %vm114, 1, 0
      %v179 = vsel %vm115, 1, 0
      %v180 = vsel %vm116, 1, 0
      %v181 = vsel %vm117, 1, 0
      %v182 = vsel %vm118, 1, 0
      %v183 = vsel %vm119, 1, 0
      %v184 = vsel %vm120, 1, 0
      %v185 = vcvt.s32.f32 %v121
      %v186 = vcvt.s32.f32 %v122
      %v187 = vcvt.s32.f32 %v123
      %v188 = vcvt.s32.f32 %v124
      %v189 = vcvt.s32.f32 %v125
      %v190 = vcvt.s32.f32 %v126
      %v191 = vcvt.s32.f32 %v127
      %v192 = vcvt.s32.f32 %v128
      %v193 = vcvt.s32.f32 %v129
      %v194 = vcvt.s32.f32 %v130
      %v195 = vcvt.s32.f32 %v131
      %v196 = vcvt.s32.f32 %v132
      %v197 = vcvt.s32.f32 %v133
      %v198 = vcvt.s32.f32 %v134
      %v199 = vcvt.s32.f32 %v135
      %v200 = vcvt.s32.f32 %v136
      %v201 = vcvt.s32.f32 %v137
      %v202 = vcvt.s32.f32 %v138
      %v203 = vcvt.s32.f32 %v139
      %v204 = vcvt.s32.f32 %v140
      %v205 = vcvt.s32.f32 %v141
      %v206 = vcvt.s32.f32 %v142
      %v207 = vcvt.s32.f32 %v143
      %v208 = vcvt.s32.f32 %v144
      %v209 = vcvt.s32.f32 %v145
      %v210 = vcvt.s32.f32 %v146
      %v211 = vcvt.s32.f32 %v147
      %v212 = vcvt.s32.f32 %v148
      %v213 = vcvt.s32.f32 %v149
      %v214 = vcvt.s32.f32 %v150
      %v215 = vcvt.s32.f32 %v151
      %v216 = vcvt.s32.f32 %v152
      %v217 = vcvt.s32.f32 %v153
      %v218 = vcvt.s32.f32 %v154
      %v219 = vcvt.s32.f32 %v155
      %v220 = vcvt.s32.f32 %v156
      %v221 = vcvt.s32.f32 %v157
      %v222 = vcvt.s32.f32 %v158
      %v223 = vcvt.s32.f32 %v159
      %v224 = vcvt.s32.f32 %v160
      %v225 = vcvt.s32.f32 %v161
      %v226 = vcvt.s32.f32 %v162
      %v227 = vcvt.s32.f32 %v163
      %v228 = vcvt.s32.f32 %v164
      %v229 = vcvt.s32.f32 %v165
      %v230 = vcvt.s32.f32 %v166
      %v231 = vcvt.s32.f32 %v167
      %v232 = vcvt.s32.f32 %v168
      %v233 = vcvt.s32.f32 %v169
      %v234 = vcvt.s32.f32 %v170
      %v235 = vcvt.s32.f32 %v171
      %v236 = vcvt.s32.f32 %v172
      %v237 = vcvt.s32.f32 %v173
      %v238 = vcvt.s32.f32 %v174
      %v239 = vcvt.s32.f32 %v175
      %v240 = vcvt.s32.f32 %v176
      %v241 = vcvt.s32.f32 %v177
      %v242 = vcvt.s32.f32 %v178
      %v243 = vcvt.s32.f32 %v179
      %v244 = vcvt.s32.f32 %v180
      %v245 = vcvt.s32.f32 %v181
      %v246 = vcvt.s32.f32 %v182
      %v247 = vcvt.s32.f32 %v183
      %v248 = vcvt.s32.f32 %v184
      %249 = vst [vmem:[#allocation2] sm:$0xff] %v185
      %250 = vst [vmem:[#allocation2 + $0x8] sm:$0xff] %v186
      %251 = vst [vmem:[#allocation2 + $0x10] sm:$0xff] %v187
      %252 = vst [vmem:[#allocation2 + $0x18] sm:$0xff] %v188
      %253 = vst [vmem:[#allocation2 + $0x20] sm:$0xff] %v189
      %254 = vst [vmem:[#allocation2 + $0x28] sm:$0xff] %v190
      %255 = vst [vmem:[#allocation2 + $0x30] sm:$0xff] %v191
      %256 = vst [vmem:[#allocation2 + $0x38] sm:$0xff] %v192
      %257 = vst [vmem:[#allocation2 + $0x40] sm:$0xff] %v193
      %258 = vst [vmem:[#allocation2 + $0x48] sm:$0xff] %v194
      %259 = vst [vmem:[#allocation2 + $0x50] sm:$0xff] %v195
      %260 = vst [vmem:[#allocation2 + $0x58] sm:$0xff] %v196
      %261 = vst [vmem:[#allocation2 + $0x60] sm:$0xff] %v197
      %262 = vst [vmem:[#allocation2 + $0x68] sm:$0xff] %v198
      %263 = vst [vmem:[#allocation2 + $0x70] sm:$0xff] %v199
      %264 = vst [vmem:[#allocation2 + $0x78] sm:$0xff] %v200
      %265 = vst [vmem:[#allocation2 + $0x80] sm:$0xff] %v201
      %266 = vst [vmem:[#allocation2 + $0x88] sm:$0xff] %v202
      %267 = vst [vmem:[#allocation2 + $0x90] sm:$0xff] %v203
      %268 = vst [vmem:[#allocation2 + $0x98] sm:$0xff] %v204
      %269 = vst [vmem:[#allocation2 + $0xa0] sm:$0xff] %v205
      %270 = vst [vmem:[#allocation2 + $0xa8] sm:$0xff] %v206
      %271 = vst [vmem:[#allocation2 + $0xb0] sm:$0xff] %v207
      %272 = vst [vmem:[#allocation2 + $0xb8] sm:$0xff] %v208
      %273 = vst [vmem:[#allocation2 + $0xc0] sm:$0xff] %v209
      %274 = vst [vmem:[#allocation2 + $0xc8] sm:$0xff] %v210
      %275 = vst [vmem:[#allocation2 + $0xd0] sm:$0xff] %v211
      %276 = vst [vmem:[#allocation2 + $0xd8] sm:$0xff] %v212
      %277 = vst [vmem:[#allocation2 + $0xe0] sm:$0xff] %v213
      %278 = vst [vmem:[#allocation2 + $0xe8] sm:$0xff] %v214
      %279 = vst [vmem:[#allocation2 + $0xf0] sm:$0xff] %v215
      %280 = vst [vmem:[#allocation2 + $0xf8] sm:$0xff] %v216
      %281 = vst [vmem:[#allocation2 + $0x100] sm:$0xff] %v217
      %282 = vst [vmem:[#allocation2 + $0x108] sm:$0xff] %v218
      %283 = vst [vmem:[#allocation2 + $0x110] sm:$0xff] %v219
      %284 = vst [vmem:[#allocation2 + $0x118] sm:$0xff] %v220
      %285 = vst [vmem:[#allocation2 + $0x120] sm:$0xff] %v221
      %286 = vst [vmem:[#allocation2 + $0x128] sm:$0xff] %v222
      %287 = vst [vmem:[#allocation2 + $0x130] sm:$0xff] %v223
      %288 = vst [vmem:[#allocation2 + $0x138] sm:$0xff] %v224
      %289 = vst [vmem:[#allocation2 + $0x140] sm:$0xff] %v225
      %290 = vst [vmem:[#allocation2 + $0x148] sm:$0xff] %v226
      %291 = vst [vmem:[#allocation2 + $0x150] sm:$0xff] %v227
      %292 = vst [vmem:[#allocation2 + $0x158] sm:$0xff] %v228
      %293 = vst [vmem:[#allocation2 + $0x160] sm:$0xff] %v229
      %294 = vst [vmem:[#allocation2 + $0x168] sm:$0xff] %v230
      %295 = vst [vmem:[#allocation2 + $0x170] sm:$0xff] %v231
      %296 = vst [vmem:[#allocation2 + $0x178] sm:$0xff] %v232
      %297 = vst [vmem:[#allocation2 + $0x180] sm:$0xff] %v233
      %298 = vst [vmem:[#allocation2 + $0x188] sm:$0xff] %v234
      %299 = vst [vmem:[#allocation2 + $0x190] sm:$0xff] %v235
      %300 = vst [vmem:[#allocation2 + $0x198] sm:$0xff] %v236
      %301 = vst [vmem:[#allocation2 + $0x1a0] sm:$0xff] %v237
      %302 = vst [vmem:[#allocation2 + $0x1a8] sm:$0xff] %v238
      %303 = vst [vmem:[#allocation2 + $0x1b0] sm:$0xff] %v239
      %304 = vst [vmem:[#allocation2 + $0x1b8] sm:$0xff] %v240
      %305 = vst [vmem:[#allocation2 + $0x1c0] sm:$0xff] %v241
      %306 = vst [vmem:[#allocation2 + $0x1c8] sm:$0xff] %v242
      %307 = vst [vmem:[#allocation2 + $0x1d0] sm:$0xff] %v243
      %308 = vst [vmem:[#allocation2 + $0x1d8] sm:$0xff] %v244
      %309 = vst [vmem:[#allocation2 + $0x1e0] sm:$0xff] %v245
      %310 = vst [vmem:[#allocation2 + $0x1e8] sm:$0xff] %v246
      %311 = vst [vmem:[#allocation2 + $0x1f0] sm:$0xff] %v247
      %312 = vst [vmem:[#allocation2 + $0x1f8] sm:$0xff] %v248
      %vm313 = vcmask 0
      %314 = vst.msk [vmem:[#allocation3] sm:$0x1] %vm313, 0.0
      %315 = vst.msk [vmem:[#allocation6] sm:$0x1] %vm313, 0.0
      %316 = vst.msk [vmem:[#allocation8] sm:$0x1] %vm313, 0.0
    $region13: #{tpu_custom_call.1} parent=1 // pred_fallthru
      _
    %s317 = sld [smem:[#allocation5]]
    %v318 = vld [vmem:[%s1] sm:$0x3]
    %v319 = vld [vmem:[%s2] sm:$0x3]
    %v320 = vlaneseq
    %v321 = vshrl.u32 %v320, 7
    %v322 = vstv 0
    %v323 = vadd.s32 %v321, %v322
    %v324 = vlaneseq
    %v325 = vand.u32 %v324, 127
    %v326 = vadd.s32 %v325, 128
    %v327 = vmul.u32 %v323, 256
    %v328 = vadd.s32 %v327, %v325
    %v329 = vadd.s32 %v327, %v326
    %v330 = vstv %s317
    %vm331 = vcmp.lt.s32.totalorder %v328, %v330
    %vm332 = vcmp.lt.s32.totalorder %v329, %v330
    %v334 = vlaneseq
    %v335 = vshrl.u32 %v334, 7
    %v336 = vsub.s32 0, %v335
    %v337 = vrot.slane %v318, %v336
    %v338 = vlaneseq
    %v339 = vshrl.u32 %v338, 7
    %v340 = vsub.s32 1, %v339
    %v341 = vrot.slane %v318, %v340
    %v344 = vsel %vm331, %v337, -1e+30
    %v345 = vsel %vm332, %v341, -1e+30
    %v346 = vmul.f32 %v344, 1.442695
    %v347 = vpow.pop %v346
    %v348 = vmul.f32 %v345, 1.442695
    %v349 = vpow.pop %v348
    %v350 = vld [vmem:[#allocation2] sm:$0xff]
    %v351 = vld [vmem:[#allocation2 + $0x8] sm:$0xff]
    %v352 = vld [vmem:[#allocation2 + $0x10] sm:$0xff]
    %v353 = vld [vmem:[#allocation2 + $0x18] sm:$0xff]
    %v354 = vld [vmem:[#allocation2 + $0x20] sm:$0xff]
    %v355 = vld [vmem:[#allocation2 + $0x28] sm:$0xff]
    %v356 = vld [vmem:[#allocation2 + $0x30] sm:$0xff]
    %v357 = vld [vmem:[#allocation2 + $0x38] sm:$0xff]
    %v358 = vld [vmem:[#allocation2 + $0x40] sm:$0xff]
    %v359 = vld [vmem:[#allocation2 + $0x48] sm:$0xff]
    %v360 = vld [vmem:[#allocation2 + $0x50] sm:$0xff]
    %v361 = vld [vmem:[#allocation2 + $0x58] sm:$0xff]
    %v362 = vld [vmem:[#allocation2 + $0x60] sm:$0xff]
    %v363 = vld [vmem:[#allocation2 + $0x68] sm:$0xff]
    %v364 = vld [vmem:[#allocation2 + $0x70] sm:$0xff]
    %v365 = vld [vmem:[#allocation2 + $0x78] sm:$0xff]
    %v366 = vld [vmem:[#allocation2 + $0x80] sm:$0xff]
    %v367 = vld [vmem:[#allocation2 + $0x88] sm:$0xff]
    %v368 = vld [vmem:[#allocation2 + $0x90] sm:$0xff]
    %v369 = vld [vmem:[#allocation2 + $0x98] sm:$0xff]
    %v370 = vld [vmem:[#allocation2 + $0xa0] sm:$0xff]
    %v371 = vld [vmem:[#allocation2 + $0xa8] sm:$0xff]
    %v372 = vld [vmem:[#allocation2 + $0xb0] sm:$0xff]
    %v373 = vld [vmem:[#allocation2 + $0xb8] sm:$0xff]
    %v374 = vld [vmem:[#allocation2 + $0xc0] sm:$0xff]
    %v375 = vld [vmem:[#allocation2 + $0xc8] sm:$0xff]
    %v376 = vld [vmem:[#allocation2 + $0xd0] sm:$0xff]
    %v377 = vld [vmem:[#allocation2 + $0xd8] sm:$0xff]
    %v378 = vld [vmem:[#allocation2 + $0xe0] sm:$0xff]
    %v379 = vld [vmem:[#allocation2 + $0xe8] sm:$0xff]
    %v380 = vld [vmem:[#allocation2 + $0xf0] sm:$0xff]
    %v381 = vld [vmem:[#allocation2 + $0xf8] sm:$0xff]
    %v382 = vld [vmem:[#allocation2 + $0x100] sm:$0xff]
    %v383 = vld [vmem:[#allocation2 + $0x108] sm:$0xff]
    %v384 = vld [vmem:[#allocation2 + $0x110] sm:$0xff]
    %v385 = vld [vmem:[#allocation2 + $0x118] sm:$0xff]
    %v386 = vld [vmem:[#allocation2 + $0x120] sm:$0xff]
    %v387 = vld [vmem:[#allocation2 + $0x128] sm:$0xff]
    %v388 = vld [vmem:[#allocation2 + $0x130] sm:$0xff]
    %v389 = vld [vmem:[#allocation2 + $0x138] sm:$0xff]
    %v390 = vld [vmem:[#allocation2 + $0x140] sm:$0xff]
    %v391 = vld [vmem:[#allocation2 + $0x148] sm:$0xff]
    %v392 = vld [vmem:[#allocation2 + $0x150] sm:$0xff]
    %v393 = vld [vmem:[#allocation2 + $0x158] sm:$0xff]
    %v394 = vld [vmem:[#allocation2 + $0x160] sm:$0xff]
    %v395 = vld [vmem:[#allocation2 + $0x168] sm:$0xff]
    %v396 = vld [vmem:[#allocation2 + $0x170] sm:$0xff]
    %v397 = vld [vmem:[#allocation2 + $0x178] sm:$0xff]
    %v398 = vld [vmem:[#allocation2 + $0x180] sm:$0xff]
    %v399 = vld [vmem:[#allocation2 + $0x188] sm:$0xff]
    %v400 = vld [vmem:[#allocation2 + $0x190] sm:$0xff]
    %v401 = vld [vmem:[#allocation2 + $0x198] sm:$0xff]
    %v402 = vld [vmem:[#allocation2 + $0x1a0] sm:$0xff]
    %v403 = vld [vmem:[#allocation2 + $0x1a8] sm:$0xff]
    %v404 = vld [vmem:[#allocation2 + $0x1b0] sm:$0xff]
    %v405 = vld [vmem:[#allocation2 + $0x1b8] sm:$0xff]
    %v406 = vld [vmem:[#allocation2 + $0x1c0] sm:$0xff]
    %v407 = vld [vmem:[#allocation2 + $0x1c8] sm:$0xff]
    %v408 = vld [vmem:[#allocation2 + $0x1d0] sm:$0xff]
    %v409 = vld [vmem:[#allocation2 + $0x1d8] sm:$0xff]
    %v410 = vld [vmem:[#allocation2 + $0x1e0] sm:$0xff]
    %v411 = vld [vmem:[#allocation2 + $0x1e8] sm:$0xff]
    %v412 = vld [vmem:[#allocation2 + $0x1f0] sm:$0xff]
    %v413 = vld [vmem:[#allocation2 + $0x1f8] sm:$0xff]
    %v414 = vld [vmem:[#allocation3] sm:$0x1]
    %416 = vset.pattern.permute.xlu0 0
    %417 = vperm.xlu0 %416, %v414
    %v418 = vpop.permute.xlu0 %417
    %v420 = vlaneseq
    %v421 = vshrl.u32 %v420, 7
    %v422 = vsub.s32 0, %v421
    %v423 = vrot.slane %v418, %v422
    %424 = vmatprep.subr.mxu0 %v351
    %425 = vmatpush1.msra.mxu0 %v350
    %426 = vmatprep.subr.mxu0 %v353
    %427 = vmatpush1.msra.mxu0 %v352
    %428 = vmatprep.subr.mxu0 %v355
    %429 = vmatpush1.msra.mxu0 %v354
    %430 = vmatprep.subr.mxu0 %v357
    %431 = vmatpush1.msra.mxu0 %v356
    %432 = vmatprep.subr.mxu0 %v359
    %433 = vmatpush1.msra.mxu0 %v358
    %434 = vmatprep.subr.mxu0 %v361
    %435 = vmatpush1.msra.mxu0 %v360
    %436 = vmatprep.subr.mxu0 %v363
    %437 = vmatpush1.msra.mxu0 %v362
    %438 = vmatprep.subr.mxu0 %v365
    %439 = vmatpush1.msra.mxu0 %v364
    %440 = vmatprep.subr.mxu0 %v367
    %441 = vmatpush1.msra.mxu0 %v366
    %442 = vmatprep.subr.mxu0 %v369
    %443 = vmatpush1.msra.mxu0 %v368
    %444 = vmatprep.subr.mxu0 %v371
    %445 = vmatpush1.msra.mxu0 %v370
    %446 = vmatprep.subr.mxu0 %v373
    %447 = vmatpush1.msra.mxu0 %v372
    %448 = vmatprep.subr.mxu0 %v375
    %449 = vmatpush1.msra.mxu0 %v374
    %450 = vmatprep.subr.mxu0 %v377
    %451 = vmatpush1.msra.mxu0 %v376
    %452 = vmatprep.subr.mxu0 %v379
    %453 = vmatpush1.msra.mxu0 %v378
    %454 = vmatprep.subr.mxu0 %v381
    %455 = vmatpush1.msra.mxu0 %v380
    %456 = vmatprep.subr.mxu0 %v383
    %457 = vmatpush1.msra.mxu0 %v382
    %458 = vmatprep.subr.mxu0 %v385
    %459 = vmatpush1.msra.mxu0 %v384
    %460 = vmatprep.subr.mxu0 %v387
    %461 = vmatpush1.msra.mxu0 %v386
    %462 = vmatprep.subr.mxu0 %v389
    %463 = vmatpush1.msra.mxu0 %v388
    %464 = vmatprep.subr.mxu0 %v391
    %465 = vmatpush1.msra.mxu0 %v390
    %466 = vmatprep.subr.mxu0 %v393
    %467 = vmatpush1.msra.mxu0 %v392
    %468 = vmatprep.subr.mxu0 %v395
    %469 = vmatpush1.msra.mxu0 %v394
    %470 = vmatprep.subr.mxu0 %v397
    %471 = vmatpush1.msra.mxu0 %v396
    %472 = vmatprep.subr.mxu0 %v399
    %473 = vmatpush1.msra.mxu0 %v398
    %474 = vmatprep.subr.mxu0 %v401
    %475 = vmatpush1.msra.mxu0 %v400
    %476 = vmatprep.subr.mxu0 %v403
    %477 = vmatpush1.msra.mxu0 %v402
    %478 = vmatprep.subr.mxu0 %v405
    %479 = vmatpush1.msra.mxu0 %v404
    %480 = vmatprep.subr.mxu0 %v407
    %481 = vmatpush1.msra.mxu0 %v406
    %482 = vmatprep.subr.mxu0 %v409
    %483 = vmatpush1.msra.mxu0 %v408
    %484 = vmatprep.subr.mxu0 %v411
    %485 = vmatpush1.msra.mxu0 %v410
    %486 = vmatprep.subr.mxu0 %v413
    %487 = vmatpush1.msra.mxu0 %v412
    %488 = vmatprep.mubr.f32.mxu0 %v349
    %489 = vmatmul.mubr.f32.gmra.mrb[0].mxu0 %v347
    %v490 = vpop.f32.mrb[0].mxu0
    %v491 = vadd.f32 %v423, %v490
    %v492 = vpop.f32.mrb[0].mxu0
    %v493 = vadd.f32 %v423, %v492
    %494 = vdwg.mxu0
    %v495 = vadd.f32 %v491, 1e-07
    %v496 = vadd.f32 %v493, 1e-07
    %v497 = vlog2.pop %v495
    %v498 = vmul.f32 %v497, 0.6931472
    %v499 = vlog2.pop %v496
    %v500 = vmul.f32 %v499, 0.6931472
    %v501 = vsub.f32 1.0, %v319
    %vm502 = vcmp.eq.f32.partialorder %v501, 0.0
    %v503 = vsel %vm502, 0.5, %v501
    %v505 = vlaneseq
    %v506 = vshrl.u32 %v505, 7
    %v507 = vsub.s32 0, %v506
    %v508 = vrot.slane %v503, %v507
    %v509 = vlaneseq
    %v510 = vshrl.u32 %v509, 7
    %v511 = vsub.s32 1, %v510
    %v512 = vrot.slane %v503, %v511
    %v515 = vsel %vm331, %v508, 0.0
    %v516 = vsel %vm332, %v512, 0.0
    %v517 = vld [vmem:[#allocation6] sm:$0x1]
    %v520 = vcombine.low %v498, %v500
    %v522 = vunpack.c.l.s4 1966171168
    %v523 = vunpack.c.0.s8 %v522
    %v524 = vlaneseq
    %v525 = vshrl.u32 %v524, 7
    %v526 = vsub.s32 %v523, %v525
    %v527 = vrot.slane %v520, %v526
    %v529 = vunpack.c.l.s4 1966171168
    %v530 = vunpack.c.0.s8 %v529
    %v531 = vlaneseq
    %v532 = vshrl.u32 %v531, 7
    %v533 = vsub.s32 %v530, %v532
    %v534 = vrot.slane %v527, %v533
    %v536 = vsub.f32 %v318, %v534
    %v539 = vcombine.low %v515, %v516
    %v541 = vunpack.c.l.s4 1966171168
    %v542 = vunpack.c.0.s8 %v541
    %v543 = vlaneseq
    %v544 = vshrl.u32 %v543, 7
    %v545 = vsub.s32 %v542, %v544
    %v546 = vrot.slane %v539, %v545
    %v548 = vunpack.c.l.s4 1966171168
    %v549 = vunpack.c.0.s8 %v548
    %v550 = vlaneseq
    %v551 = vshrl.u32 %v550, 7
    %v552 = vsub.s32 %v549, %v551
    %v553 = vrot.slane %v546, %v552
    %v555 = vmul.f32 %v536, %v553
    %v557 = vlaneseq
    %v558 = vshrl.u32 %v557, 7
    %v559 = vsub.s32 0, %v558
    %v560 = vrot.slane %v555, %v559
    %v561 = vlaneseq
    %v562 = vshrl.u32 %v561, 7
    %v563 = vsub.s32 1, %v562
    %v564 = vrot.slane %v555, %v563
    %vm567 = vcmask 1040384
    %v568 = vsel %vm567, %v560, 0.0
    %v569 = vsel %vm567, %v564, 0.0
    %v570 = vadd.f32 %v568, %v569
    %571 = vadd.xlane.f32.xlu0 %v570
    %v572 = vpop.xlane.xlu0 %571
    %v573 = vrot.slane %v572, 4
    %v574 = vadd.f32 %v572, %v573
    %v575 = vrot.slane %v574, 2
    %v576 = vadd.f32 %v574, %v575
    %v577 = vrot.slane %v576, 1
    %v578 = vadd.f32 %v576, %v577
    %s579 = vtos %v578
    %v580 = vstv %s579
    %v581 = vadd.f32 %v517, %v580
    %vm582 = vcmask 0
    %583 = vst.msk [vmem:[#allocation6] sm:$0x1] %vm582, %v581
    %v584 = vld [vmem:[#allocation8] sm:$0x1]
    %v585 = vsel %vm567, %v515, 0.0
    %v586 = vsel %vm567, %v516, 0.0
    %v587 = vadd.f32 %v585, %v586
    %588 = vadd.xlane.f32.xlu0 %v587
    %v589 = vpop.xlane.xlu0 %588
    %v590 = vrot.slane %v589, 4
    %v591 = vadd.f32 %v589, %v590
    %v592 = vrot.slane %v591, 2
    %v593 = vadd.f32 %v591, %v592
    %v594 = vrot.slane %v593, 1
    %v595 = vadd.f32 %v593, %v594
    %s596 = vtos %v595
    %v597 = vstv %s596
    %v598 = vadd.f32 %v584, %v597
    %599 = vst.msk [vmem:[#allocation8] sm:$0x1] %vm582, %v598
    %v600 = vld [vmem:[#allocation3] sm:$0x1]
    %v601 = vsel %vm567, %v347, 0.0
    %v602 = vsel %vm567, %v349, 0.0
    %v603 = vadd.f32 %v601, %v602
    %604 = vadd.xlane.f32.xlu0 %v603
    %v605 = vpop.xlane.xlu0 %604
    %v606 = vrot.slane %v605, 4
    %v607 = vadd.f32 %v605, %v606
    %v608 = vrot.slane %v607, 2
    %v609 = vadd.f32 %v607, %v608
    %v610 = vrot.slane %v609, 1
    %v611 = vadd.f32 %v609, %v610
    %s612 = vtos %v611
    %v613 = vstv %s612
    %v614 = vadd.f32 %v600, %v613
    %615 = vst.msk [vmem:[#allocation3] sm:$0x1] %vm582, %v614
    // Predicated region
    $region14: #{tpu_custom_call.1} parent=1 // pred_check
      _
    $region15: #{tpu_custom_call.1} parent=1 // pred_check_branch
      %617 = sbr.rel (0) target = $region17
    $region16: #{tpu_custom_call.1} parent=1 // pred_region
      %s619 = ssub.s32 16, 16
      %620 = vsyncadd [#allocation7], %s619
      %s622 = sshll.u32 [#allocation6], 4
      %s623 = int_to_ptr.vmem [resolvable:$true] %s622
      %625 = dma.vmem_to_hbm [thread:$0]  %s623, 16, %s3, [#allocation7]
    $region17: #{tpu_custom_call.1} parent=1 // pred_fallthru
      _
    // Predicated region
    $region18: #{tpu_custom_call.1} parent=1 // pred_check
      _
    $region19: #{tpu_custom_call.1} parent=1 // pred_check_branch
      %627 = sbr.rel (0) target = $region21
    $region20: #{tpu_custom_call.1} parent=1 // pred_region
      %s629 = ssub.s32 16, 16
      %630 = vsyncadd [#allocation9], %s629
      %s632 = sshll.u32 [#allocation8], 4
      %s633 = int_to_ptr.vmem [resolvable:$true] %s632
      %635 = dma.vmem_to_hbm [thread:$0]  %s633, 16, %s4, [#allocation9]
    $region21: #{tpu_custom_call.1} parent=1 // pred_fallthru
      _
    // Predicated region
    $region22: #{tpu_custom_call.1} parent=1 // pred_check
      _
    $region23: #{tpu_custom_call.1} parent=1 // pred_check_branch
      %637 = sbr.rel (0) target = $region25
    $region24: #{tpu_custom_call.1} parent=1 // pred_region
      %638 = dma.done [#allocation7], 16
    $region25: #{tpu_custom_call.1} parent=1 // pred_fallthru
      _
    // Predicated region
    $region26: #{tpu_custom_call.1} parent=1 // pred_check
      _
    $region27: #{tpu_custom_call.1} parent=1 // pred_check_branch
      %640 = sbr.rel (0) target = $region29
    $region28: #{tpu_custom_call.1} parent=1 // pred_region
      %641 = dma.done [#allocation9], 16
    $region29: #{tpu_custom_call.1} parent=1 // pred_fallthru
      _
    %642 = vsyncpa [#allocation7], 1
    %643 = vsyncpa [#allocation9], 1

</llo_original>
